<compile_context>
chip_gen: v7x
topology: tpu7x:2x2x1
jax: 0.10.0
libtpu: 0.0.40
codegen_flags: <defaults>
</compile_context>

<pallas_src>
import jax
import jax.numpy as jnp
from jax.experimental import pallas as pl
from jax.experimental.pallas import tpu as pltpu

_LANES = 128
_MAX_DMA_CHUNKS = 4  # 2-4 outstanding descriptors is enough to overlap issue latency.


def _sublane_multiple(dtype) -> int:
    """Rows-per-vreg for this dtype (8 for 32-bit, 16 for bf16, 32 for int8)."""
    itemsize = jnp.dtype(dtype).itemsize
    return max(8, 32 // itemsize)


def _chunk_row_ranges(rows: int, sub: int):
    """Static (start, size) row ranges; sublane-aligned when rows allows it."""
    if rows % sub == 0 and rows // sub >= 2:
        groups = rows // sub
        n = min(_MAX_DMA_CHUNKS, groups)
        base, rem = divmod(groups, n)
        ranges, start = [], 0
        for i in range(n):
            size = (base + (1 if i < rem else 0)) * sub
            if size:
                ranges.append((start, size))
                start += size
        return ranges
    return [(0, rows)]


def _make_hbm_copy_kernel(chunks):
    """HBM->HBM identity copy via chunked async DMA (no VMEM staging)."""

    def kernel(x_hbm, o_hbm, sem):
        # NOTE: chunk i reads exactly the rows it writes (identical in/out
        # index ranges), so this is safe even if the output buffer aliases
        # the input (donate=True).  Do not change one side without the other.
        copies = [
            pltpu.make_async_copy(
                x_hbm.at[pl.ds(start, size), :],
                o_hbm.at[pl.ds(start, size), :],
                sem.at[i],
            )
            for i, (start, size) in enumerate(chunks)
        ]
        for cp in copies:   # issue all descriptors first (overlap)
            cp.start()
        for cp in copies:   # then drain
            cp.wait()

    return kernel


def _pallas_identity_2d(x2d, *, donate: bool = False):
    """Direct HBM->HBM copy of a lane-dense (rows, 128) slab."""
    rows, lanes = x2d.shape
    dtype = x2d.dtype
    itemsize = jnp.dtype(dtype).itemsize
    assert lanes == _LANES, (rows, lanes, dtype)

    chunks = _chunk_row_ranges(rows, _sublane_multiple(dtype))
    total_bytes = rows * lanes * itemsize

    kwargs = dict(
        out_shape=jax.ShapeDtypeStruct((rows, lanes), dtype),
        in_specs=[pl.BlockSpec(memory_space=pl.ANY)],
        out_specs=pl.BlockSpec(memory_space=pl.ANY),
        scratch_shapes=[pltpu.SemaphoreType.DMA((len(chunks),))],
        # Pure bandwidth op: zero flops, 1 read + 1 write of the tensor.
        cost_estimate=pl.CostEstimate(
            flops=0, transcendentals=0, bytes_accessed=2 * total_bytes
        ),
    )
    if donate:
        # Output buffer reuses the input buffer (halves peak HBM footprint).
        # Only safe because each DMA chunk copies a range onto itself.
        kwargs["input_output_aliases"] = {0: 0}

    return pl.pallas_call(_make_hbm_copy_kernel(chunks), **kwargs)(x2d)


def autoencoder_forward(x, *, materialize: bool = False, donate: bool = False):
    """JAX/Pallas equivalent of AutoEncoder.forward.

    encoder: x.view(-1, ...)  -> reshape (no data movement)
    decoder: x.view(-1, ...)  -> reshape (no data movement)
    Net effect: identity on values; output has the input's shape and dtype.

    materialize=False (default): metadata-only reshape -- the exact
    translation of view()->view(), zero HBM traffic.
    materialize=True: route the values through the HBM->HBM DMA copy kernel
    (useful when a fresh buffer is required).  donate=True lets the output
    alias the input buffer when the caller no longer needs the input.
    """
    orig_shape = x.shape
    total = x.size

    if not materialize or total == 0:
        # Metadata-only identity: exactly what view()->view() does.
        return jnp.reshape(x, orig_shape)

    if total % _LANES != 0:
        # Ragged size: padding/slicing around a mem-bound copy would add two
        # extra full HBM passes; the zero-copy reshape is exact and faster.
        return jnp.reshape(x, orig_shape)

    rows = total // _LANES
    # Row-major flatten to a lane-dense slab (metadata reshape, not a copy).
    x2d = jnp.reshape(x, (rows, _LANES))
    y2d = _pallas_identity_2d(x2d, donate=donate)
    return jnp.reshape(y2d, orig_shape)


if __name__ == "__main__":
    key = jax.random.PRNGKey(0)

    # NCHW input consistent with a conv-style sensation model.
    # 2*4*16*16 = 2048 elements = (16 rows, 128 lanes): exact lane-dense slab,
    # so the HBM->HBM DMA path runs (2 sublane-aligned chunks of 8 rows).
    x = jax.random.normal(key, (2, 4, 16, 16), dtype=jnp.float32)
    y = autoencoder_forward(x, materialize=True)  # exercise the Pallas kernel
    y = jax.block_until_ready(y)
    assert y.shape == x.shape, (y.shape, x.shape)
    assert y.dtype == x.dtype
    assert bool(jnp.all(y == x)), "identity forward mismatch (pallas DMA path)"

    # Default path: zero-copy reshape (the strictly optimal translation).
    y0 = jax.block_until_ready(autoencoder_forward(x))
    assert y0.shape == x.shape and y0.dtype == x.dtype
    assert bool(jnp.all(y0 == x)), "identity forward mismatch (zero-copy path)"

    # Ragged size -> zero-copy fallback even when materialize=True.
    x2 = jax.random.normal(jax.random.PRNGKey(1), (2, 3, 5, 7), dtype=jnp.float32)
    y2 = jax.block_until_ready(autoencoder_forward(x2, materialize=True))
    assert y2.shape == x2.shape and y2.dtype == x2.dtype
    assert bool(jnp.all(y2 == x2)), "identity forward mismatch (ragged fallback)"

    print("KERNEL_OK")
</pallas_src>

<mosaic_0001>
module attributes {stable_mosaic.version = 11 : i64} {
  func.func @kernel(%arg0: memref<16x128xf32, #tpu.memory_space<any>>, %arg1: memref<16x128xf32, #tpu.memory_space<any>>, %arg2: memref<2x!tpu.dma_semaphore, #tpu.memory_space<semaphore_mem>>) attributes {dimension_semantics = [], scalar_prefetch = 0 : i64, scratch_operands = 1 : i64, tpu.core_type = #tpu.core_type<tc>} {
    %c0_i32 = arith.constant 0 : i32
    %c0_i32_0 = arith.constant 0 : i32
    %c0_i32_1 = arith.constant 0 : i32
    %0 = tpu.memref_slice %arg0[%c0_i32_0, %c0_i32_1] : memref<16x128xf32, #tpu.memory_space<any>> -> memref<8x128xf32, #tpu.memory_space<any>>
    %c0_i32_2 = arith.constant 0 : i32
    %c0_i32_3 = arith.constant 0 : i32
    %1 = tpu.memref_slice %arg1[%c0_i32_2, %c0_i32_3] : memref<16x128xf32, #tpu.memory_space<any>> -> memref<8x128xf32, #tpu.memory_space<any>>
    %2 = tpu.memref_slice %arg2[%c0_i32] : memref<2x!tpu.dma_semaphore, #tpu.memory_space<semaphore_mem>> -> memref<1x!tpu.dma_semaphore, #tpu.memory_space<semaphore_mem>>
    %3 = tpu.memref_squeeze %2 : memref<1x!tpu.dma_semaphore, #tpu.memory_space<semaphore_mem>> -> memref<!tpu.dma_semaphore, #tpu.memory_space<semaphore_mem>>
    tpu.enqueue_dma source(%0 : memref<8x128xf32, #tpu.memory_space<any>>) target(%1 : memref<8x128xf32, #tpu.memory_space<any>>) target_semaphore(%3 : memref<!tpu.dma_semaphore, #tpu.memory_space<semaphore_mem>>)
    %c1_i32 = arith.constant 1 : i32
    %c8_i32 = arith.constant 8 : i32
    %c0_i32_4 = arith.constant 0 : i32
    %4 = tpu.memref_slice %arg0[%c8_i32, %c0_i32_4] : memref<16x128xf32, #tpu.memory_space<any>> -> memref<8x128xf32, #tpu.memory_space<any>>
    %c8_i32_5 = arith.constant 8 : i32
    %c0_i32_6 = arith.constant 0 : i32
    %5 = tpu.memref_slice %arg1[%c8_i32_5, %c0_i32_6] : memref<16x128xf32, #tpu.memory_space<any>> -> memref<8x128xf32, #tpu.memory_space<any>>
    %6 = tpu.memref_slice %arg2[%c1_i32] : memref<2x!tpu.dma_semaphore, #tpu.memory_space<semaphore_mem>> -> memref<1x!tpu.dma_semaphore, #tpu.memory_space<semaphore_mem>>
    %7 = tpu.memref_squeeze %6 : memref<1x!tpu.dma_semaphore, #tpu.memory_space<semaphore_mem>> -> memref<!tpu.dma_semaphore, #tpu.memory_space<semaphore_mem>>
    tpu.enqueue_dma source(%4 : memref<8x128xf32, #tpu.memory_space<any>>) target(%5 : memref<8x128xf32, #tpu.memory_space<any>>) target_semaphore(%7 : memref<!tpu.dma_semaphore, #tpu.memory_space<semaphore_mem>>)
    %c0_i32_7 = arith.constant 0 : i32
    %c0_i32_8 = arith.constant 0 : i32
    %c0_i32_9 = arith.constant 0 : i32
    %8 = tpu.memref_slice %arg0[%c0_i32_8, %c0_i32_9] : memref<16x128xf32, #tpu.memory_space<any>> -> memref<8x128xf32, #tpu.memory_space<any>>
    %c0_i32_10 = arith.constant 0 : i32
    %c0_i32_11 = arith.constant 0 : i32
    %9 = tpu.memref_slice %arg1[%c0_i32_10, %c0_i32_11] : memref<16x128xf32, #tpu.memory_space<any>> -> memref<8x128xf32, #tpu.memory_space<any>>
    %10 = tpu.memref_slice %arg2[%c0_i32_7] : memref<2x!tpu.dma_semaphore, #tpu.memory_space<semaphore_mem>> -> memref<1x!tpu.dma_semaphore, #tpu.memory_space<semaphore_mem>>
    %11 = tpu.memref_squeeze %10 : memref<1x!tpu.dma_semaphore, #tpu.memory_space<semaphore_mem>> -> memref<!tpu.dma_semaphore, #tpu.memory_space<semaphore_mem>>
    tpu.wait_dma2 semaphore(%11 : memref<!tpu.dma_semaphore, #tpu.memory_space<semaphore_mem>>) src(%8 : memref<8x128xf32, #tpu.memory_space<any>>) dst(%9 : memref<8x128xf32, #tpu.memory_space<any>>)
    %c1_i32_12 = arith.constant 1 : i32
    %c8_i32_13 = arith.constant 8 : i32
    %c0_i32_14 = arith.constant 0 : i32
    %12 = tpu.memref_slice %arg0[%c8_i32_13, %c0_i32_14] : memref<16x128xf32, #tpu.memory_space<any>> -> memref<8x128xf32, #tpu.memory_space<any>>
    %c8_i32_15 = arith.constant 8 : i32
    %c0_i32_16 = arith.constant 0 : i32
    %13 = tpu.memref_slice %arg1[%c8_i32_15, %c0_i32_16] : memref<16x128xf32, #tpu.memory_space<any>> -> memref<8x128xf32, #tpu.memory_space<any>>
    %14 = tpu.memref_slice %arg2[%c1_i32_12] : memref<2x!tpu.dma_semaphore, #tpu.memory_space<semaphore_mem>> -> memref<1x!tpu.dma_semaphore, #tpu.memory_space<semaphore_mem>>
    %15 = tpu.memref_squeeze %14 : memref<1x!tpu.dma_semaphore, #tpu.memory_space<semaphore_mem>> -> memref<!tpu.dma_semaphore, #tpu.memory_space<semaphore_mem>>
    tpu.wait_dma2 semaphore(%15 : memref<!tpu.dma_semaphore, #tpu.memory_space<semaphore_mem>>) src(%12 : memref<8x128xf32, #tpu.memory_space<any>>) dst(%13 : memref<8x128xf32, #tpu.memory_space<any>>)
    return
  }
}

</mosaic_0001>

<llo_original>
// kernel: tpu_custom_call.1
$region0: #{tpu_custom_call.1}
  #allocation0 [shape = 'u32[]', space=smem, size = 0x4, offset = 0x4, fixed_abs, tag = 'smem constant byte address 0x4 - core index']
  #allocation1 [shape = 'u32[144,128]{1,0:T(1,128)}', space=vmem, size = 0x12000, scoped, tag = 'internal scratch']
  #allocation2 [shape = 's32[2]{0}', space=sflag, size = 0x8, scoped, tag = 'scratch operand']
  #allocation3 [shape = 's32[]', space=sflag, size = 0x4, offset = 0, fixed_abs, tag = 'sflag constant byte address 0x0 - dummy sync flag']
  #allocation4 [shape = 'u32[0]{0}', space=smem, size = 0, offset = 0, fixed_abs, tag = 'smem constant byte address 0x0 - null']
  #allocation5 [shape = 's32[]', space=sflag, size = 0x4, offset = 0, fixed_abs, tag = 'sflag constant byte address 0x0 - dummy sync flag']
  #allocation6 [shape = 'u32[0]{0}', space=smem, size = 0, offset = 0, fixed_abs, tag = 'smem constant byte address 0x0 - null']
  %s0 = inlined_call_operand.hbm [shape: f32[16,128], index: 0, kind: input, shape index: {}]
  %s1 = inlined_call_operand.hbm [shape: f32[16,128], index: 1, kind: output, shape index: {}]
  %s2 = sld [smem:[#allocation0]]
  $region2: #{tpu_custom_call.1} parent=0
    _
  %s4 = ssub.s32 1, %s2
  %s5 = scalar_select 0, %s4, %s2
  %s7 = sshll.u32 1, 14
  %s8 = sxor.u32 4294967295, %s7
  %s11 = sshll.u32 3, 24
  %s12 = sxor.u32 4294967295, %s11
  %s13 = sand.u32 0, %s12
  %s15 = sor.u32 %s13, 0
  %18 = dma.general %s0, 128, %s1, [#allocation2], [#allocation3], [#allocation4], %s15, 0
  %s19 = scalar_lea.hbm %s0, 128
  %s20 = scalar_lea.hbm %s1, 128
  %s21 = scalar_lea.sflag [#allocation2], 1
  %s23 = sshll.u32 1, 14
  %s24 = sxor.u32 4294967295, %s23
  %s27 = sshll.u32 3, 24
  %s28 = sxor.u32 4294967295, %s27
  %s29 = sand.u32 0, %s28
  %s31 = sor.u32 %s29, 0
  %34 = dma.general %s19, 128, %s20, %s21, [#allocation5], [#allocation6], %s31, 0
  %s35 = smul.u32 8, 1
  %s36 = sshll.u32 %s35, 4
  %37 = dma.done [#allocation2], %s36
  %s38 = sshll.u32 %s35, 4
  %39 = dma.done %s21, %s38
  %40 = vsyncmov [#allocation2]
  %s41 = vpop.sfrf %40
  %p42 = scmp.eq.s32.totalorder %s41, 0
  %p43 = pneg %p42
  %45 = shalt.err (%p43)
  %s46 = scalar_lea.sflag [#allocation2], 1
  %47 = vsyncmov %s46
  %s48 = vpop.sfrf %47
  %p49 = scmp.eq.s32.totalorder %s48, 0
  %p50 = pneg %p49
  %52 = shalt.err (%p50)

</llo_original>
